<compile_context>
chip_gen: v6e
topology: v6e:2x2x1
jax: 0.10.0
libtpu: 0.0.40
codegen_flags: <defaults>
</compile_context>

<pallas_src>
import math
from functools import partial

import jax
import jax.numpy as jnp
from jax import lax
from jax.experimental import pallas as pl
from jax.experimental.pallas import tpu as pltpu


# ----------------------------------------------------------------------------
# Pallas kernel: one grid step handles `block_b` batch elements, all N heads.
# ----------------------------------------------------------------------------
def hard_attention_kernel(x_ref, pe_ref, wq_ref, wk_ref, g_ref,
                          out_ref, alphas_ref, *, N, A, temperature):
    Bt, S, H = x_ref.shape

    xb = x_ref[...]                                        # (Bt, S, H)
    pos = xb + pe_ref[...][None, :, :]                     # (Bt, S, H)

    # K path collapses algebraically: sum_t K[b,t,:] = (sum_t pos[b,t,:]) @ Wk.
    pos_sum = jnp.sum(pos, axis=1)                         # (Bt, H)
    ksum = jnp.dot(pos_sum, wk_ref[...],
                   preferred_element_type=jnp.float32)     # (Bt, N*A)

    # Fold Wq into the per-head k-sum instead of materialising the full Q projection
    # (saves a factor A of MXU work and the head-mask iota).
    # w_eff[b,n,h] = sum_a Wq[h, n*A+a] * ksum[b, n*A+a]
    # logits[b,n,s] = scale * pos[b,s,:] . w_eff[b,n,:]
    wq = wq_ref[...]                                       # (H, N*A)
    scale = 1.0 / (math.sqrt(H) * S)
    w_eff_heads = []
    for n in range(N):                                     # N is small & static
        wq_n = wq[:, n * A:(n + 1) * A]                    # (H, A)
        ks_n = ksum[:, n * A:(n + 1) * A]                  # (Bt, A)
        w_eff_heads.append(
            jnp.einsum('ba,ha->bh', ks_n, wq_n,
                       preferred_element_type=jnp.float32))        # (Bt, H)
    w_eff = jnp.stack(w_eff_heads, axis=1)                 # (Bt, N, H)
    logits = jnp.einsum('bnh,bsh->bns', w_eff, pos,
                        preferred_element_type=jnp.float32) * scale  # (Bt, N, S)
    logits2d = logits.reshape(Bt * N, S)                   # b-major, n-minor rows

    # Hard gumbel-softmax forward value: one_hot(argmax((logits + g) / tau)).
    y = (logits2d + g_ref[...]) * (1.0 / temperature)      # (Bt*N, S)
    m = jnp.max(y, axis=-1, keepdims=True)
    s_iota = lax.broadcasted_iota(jnp.int32, (Bt * N, S), 1)
    # first index attaining the max (matches torch/jnp argmax tie-breaking)
    idx = jnp.min(jnp.where(y == m, s_iota, S), axis=-1, keepdims=True)
    onehot = (s_iota == idx).astype(jnp.float32)           # (Bt*N, S)

    # Single dense 2-D store per output.
    alphas_ref[...] = onehot

    # Row selection via the one-hot.
    # TODO(synk): for large S replace this matmul with a data-dependent row gather.
    out = jnp.einsum('bns,bsh->bnh', onehot.reshape(Bt, N, S), xb,
                     preferred_element_type=jnp.float32)   # (Bt, N, H)
    out_ref[...] = out.reshape(Bt * N, H).astype(out_ref.dtype)


# ----------------------------------------------------------------------------
# Per-generation block sizing
# ----------------------------------------------------------------------------
def _device_params():
    """(vmem_budget_bytes, min_grid_steps, target_M_rows) per TPU generation."""
    kind = ""
    try:
        kind = jax.devices()[0].device_kind.lower()
    except Exception:
        pass
    if "v5" in kind and ("lite" in kind or "5e" in kind):
        return 128 << 20, 1, 1024      # v5e: 1 TC, 128 MiB VMEM -> big blocks, no forced split
    if "v6" in kind:
        return 128 << 20, 2, 1024      # v6e: 1 TC, keep >=2 steps for DMA/compute overlap
    if "v7" in kind:
        return 64 << 20, 4, 512        # v7x: 2 TCs, half the VMEM -> >=2 steps per core
    return 64 << 20, 4, 512            # unknown: conservative (v7x-like)


def _choose_block_b(B, S, H, N, A):
    """Largest block_b that (a) divides B, (b) keeps flattened (block_b*N, ...) blocks
    sublane-aligned (or full), (c) respects per-generation VMEM / grid-step targets."""
    vmem_budget, min_steps, target_rows = _device_params()
    NA = N * A
    # double-buffered per-step f32 bytes per batch element (x, gumbel, out, alphas)
    per_b = (S * H + 2 * N * S + N * H) * 4 * 2
    invariant = (S * H + 2 * H * NA) * 4 * 2
    tile_budget = int(vmem_budget * 0.4)                   # headroom for intermediates
    cap = max(1, (tile_budget - invariant) // max(per_b, 1))
    cap = min(cap, max(1, target_rows // max(S, 1)))       # target M rows per step
    cap = min(cap, max(1, B // min_steps))                 # >= min_steps grid steps if possible

    valid = [d for d in range(1, B + 1)
             if B % d == 0 and ((d * N) % 8 == 0 or d == B)]
    le_cap = [d for d in valid if d <= cap]
    block_b = max(le_cap) if le_cap else min(valid)
    vmem_limit = int(vmem_budget * 3 // 4)
    return block_b, vmem_limit


# ----------------------------------------------------------------------------
# Wrapper
# ----------------------------------------------------------------------------
def hard_attention_pallas(x, pe, wq_t, wk_t, gumbel, *, N, A, temperature,
                          block_b=None):
    B, S, H = x.shape
    assert pe.shape == (S, H)
    assert wq_t.shape == (H, N * A) and wk_t.shape == (H, N * A)
    assert gumbel.shape == (B, N, S)

    auto_block_b, vmem_limit = _choose_block_b(B, S, H, N, A)
    if block_b is None:
        block_b = auto_block_b
    assert B % block_b == 0
    assert (block_b * N) % 8 == 0 or block_b == B, "flattened block must be sublane-aligned"
    grid = (B // block_b,)
    bn = block_b * N

    # Lane/sublane-dense layouts for the (B, N, *) tensors.
    g2d = gumbel.reshape(B * N, S)

    kernel = partial(hard_attention_kernel, N=N, A=A, temperature=temperature)
    out_shapes = (
        jax.ShapeDtypeStruct((B * N, H), jnp.float32),   # attended x (flattened)
        jax.ShapeDtypeStruct((B * N, S), jnp.float32),   # alphas one-hot (flattened)
    )

    out2d, alphas2d = pl.pallas_call(
        kernel,
        out_shape=out_shapes,
        grid=grid,
        in_specs=[
            pl.BlockSpec((block_b, S, H), lambda b: (b, 0, 0)),   # x
            pl.BlockSpec((S, H), lambda b: (0, 0)),               # positional encoding (grid-invariant)
            pl.BlockSpec((H, N * A), lambda b: (0, 0)),           # Wq^T (grid-invariant)
            pl.BlockSpec((H, N * A), lambda b: (0, 0)),           # Wk^T (grid-invariant)
            pl.BlockSpec((bn, S), lambda b: (b, 0)),              # gumbel noise (flattened)
        ],
        out_specs=(
            pl.BlockSpec((bn, H), lambda b: (b, 0)),
            pl.BlockSpec((bn, S), lambda b: (b, 0)),
        ),
        compiler_params=pltpu.CompilerParams(
            dimension_semantics=("parallel",),
            vmem_limit_bytes=vmem_limit),
    )(x, pe, wq_t, wk_t, g2d)

    return out2d.reshape(B, N, H), alphas2d.reshape(B, N, S)


# ----------------------------------------------------------------------------
# Pure-JAX reference (mirrors the PyTorch forward exactly, original reduction order)
# ----------------------------------------------------------------------------
def hard_attention_ref(x, pe, wq_t, wk_t, gumbel, *, N, A, temperature):
    B, S, H = x.shape
    pos = x + pe[None, :, :]
    Q = (pos @ wq_t).reshape(B, S, N, A).transpose(0, 2, 1, 3)    # (B, N, S, A)
    K = (pos @ wk_t).reshape(B, S, N, A).transpose(0, 2, 1, 3)
    att = jnp.einsum('bnsh,bnth->bnst', Q, K) / math.sqrt(H)
    att = jnp.sum(att, axis=-1) / S                               # (B, N, S)
    y = (att + gumbel) / temperature
    idx = jnp.argmax(y, axis=-1)
    alphas = jax.nn.one_hot(idx, S, dtype=jnp.float32)            # hard gumbel-softmax fwd value
    out = jnp.einsum('bns,bsh->bnh', alphas, x)
    return out, alphas, y


def sinusoidal_pe(seq_len, d_model):
    position = jnp.arange(seq_len, dtype=jnp.float32)[:, None]
    div_term = jnp.exp(jnp.arange(0, d_model, 2, dtype=jnp.float32)
                       * (-math.log(10000.0) / d_model))
    pe = jnp.zeros((seq_len, d_model), jnp.float32)
    pe = pe.at[:, 0::2].set(jnp.sin(position * div_term))
    pe = pe.at[:, 1::2].set(jnp.cos(position * div_term))
    return pe


def _run_case(key, *, B, S, H, A, N, temperature):
    kx, kq, kk, kg = jax.random.split(key, 4)
    x = jax.random.normal(kx, (B, S, H), dtype=jnp.float32)
    # deterministic "Linear" weights: PyTorch stores (A*N, H); we use the transpose
    wq_t = jax.random.normal(kq, (H, A * N), dtype=jnp.float32) / math.sqrt(H)
    wk_t = jax.random.normal(kk, (H, A * N), dtype=jnp.float32) / math.sqrt(H)
    pe = sinusoidal_pe(S, H)
    # Gumbel noise sampled once (deterministic), shared by kernel and reference.
    gumbel = jax.random.gumbel(kg, (B, N, S), dtype=jnp.float32)

    out, alphas = hard_attention_pallas(
        x, pe, wq_t, wk_t, gumbel, N=N, A=A, temperature=temperature)
    jax.block_until_ready((out, alphas))

    out_ref, alphas_ref, y_ref = hard_attention_ref(
        x, pe, wq_t, wk_t, gumbel, N=N, A=A, temperature=temperature)

    assert out.shape == (B, N, H) and alphas.shape == (B, N, S)
    # alphas must be a valid hard one-hot per (b, n)
    assert bool(jnp.all(jnp.sum(alphas, axis=-1) == 1.0)), "alphas not one-hot"
    assert bool(jnp.all((alphas == 0.0) | (alphas == 1.0))), "alphas not 0/1"
    # kernel argmax agrees with the reference up to fp reassociation:
    # the selected score must be within eps of the reference max.
    idx = jnp.argmax(alphas, axis=-1)
    sel = jnp.take_along_axis(y_ref, idx[..., None], axis=-1)[..., 0]
    assert bool(jnp.all(sel >= jnp.max(y_ref, axis=-1) - 1e-4)), "argmax disagrees vs reference"
    # output must be exactly the x-row selected by the kernel's own alphas
    gathered = jnp.einsum('bns,bsh->bnh', alphas, x)
    assert bool(jnp.allclose(out, gathered, atol=1e-5, rtol=1e-5)), "output/alphas inconsistent"
    # and (barring exact fp ties) matches the reference forward bit-for-bit selection
    if bool(jnp.array_equal(alphas, alphas_ref)):
        assert bool(jnp.allclose(out, out_ref, atol=1e-5, rtol=1e-5)), "output mismatch vs reference"


if __name__ == "__main__":
    key = jax.random.PRNGKey(0)
    k1, k2 = jax.random.split(key)

    # Small shapes consistent with the module: (batch, seq, hidden) + N heads.
    _run_case(k1, B=2, S=8, H=32, A=16, N=2, temperature=0.1)
    # Exercise the batched / multi-step path.
    _run_case(k2, B=8, S=8, H=32, A=16, N=2, temperature=0.1)

    print("KERNEL_OK")
</pallas_src>

<mosaic_0001>
module attributes {stable_mosaic.version = 11 : i64} {
  func.func @hard_attention_kernel(%arg0: i32, %arg1: memref<2x8x32xf32, #tpu.memory_space<vmem>>, %arg2: memref<8x32xf32, #tpu.memory_space<vmem>>, %arg3: memref<32x32xf32, #tpu.memory_space<vmem>>, %arg4: memref<32x32xf32, #tpu.memory_space<vmem>>, %arg5: memref<4x8xf32, #tpu.memory_space<vmem>>, %arg6: memref<4x32xf32, #tpu.memory_space<vmem>>, %arg7: memref<4x8xf32, #tpu.memory_space<vmem>>) attributes {dimension_semantics = [#tpu.dimension_semantics<parallel>], iteration_bounds = array<i64: 1>, scalar_prefetch = 0 : i64, scratch_operands = 0 : i64, tpu.core_type = #tpu.core_type<tc>, window_params = [{transform_indices = @transform_0, window_bounds = array<i64: 2, 8, 32>}, {pipeline_mode = #tpu.pipeline_mode<synchronous>, transform_indices = @transform_1, window_bounds = array<i64: 8, 32>}, {pipeline_mode = #tpu.pipeline_mode<synchronous>, transform_indices = @transform_2, window_bounds = array<i64: 32, 32>}, {pipeline_mode = #tpu.pipeline_mode<synchronous>, transform_indices = @transform_3, window_bounds = array<i64: 32, 32>}, {transform_indices = @transform_4, window_bounds = array<i64: 4, 8>}, {transform_indices = @transform_5, window_bounds = array<i64: 4, 32>}, {transform_indices = @transform_6, window_bounds = array<i64: 4, 8>}]} {
    %c0 = arith.constant 0 : index
    %c0_0 = arith.constant 0 : index
    %c0_1 = arith.constant 0 : index
    %0 = vector.load %arg1[%c0, %c0_0, %c0_1] : memref<2x8x32xf32, #tpu.memory_space<vmem>>, vector<2x8x32xf32>
    %c0_2 = arith.constant 0 : index
    %c0_3 = arith.constant 0 : index
    %1 = vector.load %arg2[%c0_2, %c0_3] : memref<8x32xf32, #tpu.memory_space<vmem>>, vector<8x32xf32>
    %2 = vector.shape_cast %1 : vector<8x32xf32> to vector<1x8x32xf32>
    %3 = vector.broadcast %2 : vector<1x8x32xf32> to vector<2x8x32xf32>
    %4 = arith.addf %0, %3 : vector<2x8x32xf32>
    %cst = arith.constant dense<0.000000e+00> : vector<2x32xf32>
    %5 = vector.multi_reduction <add>, %4, %cst [1] : vector<2x8x32xf32> to vector<2x32xf32>
    %c0_4 = arith.constant 0 : index
    %c0_5 = arith.constant 0 : index
    %6 = vector.load %arg4[%c0_4, %c0_5] : memref<32x32xf32, #tpu.memory_space<vmem>>, vector<32x32xf32>
    %cst_6 = arith.constant dense<0.000000e+00> : vector<2x32xf32>
    %7 = tpu.matmul %5, %6, %cst_6 {dimension_numbers = #tpu.dot_dimension_numbers<[1], [0], [0], [1], [0, 0, 1, 1], [], []>} : vector<2x32xf32>, vector<32x32xf32>, vector<2x32xf32> -> vector<2x32xf32>
    %c0_7 = arith.constant 0 : index
    %c0_8 = arith.constant 0 : index
    %8 = vector.load %arg3[%c0_7, %c0_8] : memref<32x32xf32, #tpu.memory_space<vmem>>, vector<32x32xf32>
    %9 = vector.extract_strided_slice %8 {offsets = [0, 0], sizes = [32, 16], strides = [1, 1]} : vector<32x32xf32> to vector<32x16xf32>
    %10 = vector.extract_strided_slice %7 {offsets = [0, 0], sizes = [2, 16], strides = [1, 1]} : vector<2x32xf32> to vector<2x16xf32>
    "tpu.trace_start"() <{level = 10 : i32, message = "ba,ha->bh"}> : () -> ()
    %cst_9 = arith.constant dense<0.000000e+00> : vector<2x32xf32>
    %11 = tpu.matmul %10, %9, %cst_9 {dimension_numbers = #tpu.dot_dimension_numbers<[1], [1], [0], [0], [0, 0, 1, 0], [], []>} : vector<2x16xf32>, vector<32x16xf32>, vector<2x32xf32> -> vector<2x32xf32>
    "tpu.trace_stop"() : () -> ()
    %12 = vector.extract_strided_slice %8 {offsets = [0, 16], sizes = [32, 16], strides = [1, 1]} : vector<32x32xf32> to vector<32x16xf32>
    %13 = vector.extract_strided_slice %7 {offsets = [0, 16], sizes = [2, 16], strides = [1, 1]} : vector<2x32xf32> to vector<2x16xf32>
    "tpu.trace_start"() <{level = 10 : i32, message = "ba,ha->bh"}> : () -> ()
    %cst_10 = arith.constant dense<0.000000e+00> : vector<2x32xf32>
    %14 = tpu.matmul %13, %12, %cst_10 {dimension_numbers = #tpu.dot_dimension_numbers<[1], [1], [0], [0], [0, 0, 1, 0], [], []>} : vector<2x16xf32>, vector<32x16xf32>, vector<2x32xf32> -> vector<2x32xf32>
    "tpu.trace_stop"() : () -> ()
    %15 = vector.shape_cast %11 : vector<2x32xf32> to vector<2x1x32xf32>
    %16 = vector.shape_cast %14 : vector<2x32xf32> to vector<2x1x32xf32>
    %17 = tpu.concatenate %15, %16 in 1 : vector<2x1x32xf32>, vector<2x1x32xf32> -> vector<2x2x32xf32>
    "tpu.trace_start"() <{level = 10 : i32, message = "bnh,bsh->bns"}> : () -> ()
    %cst_11 = arith.constant dense<0.000000e+00> : vector<2x2x8xf32>
    %18 = tpu.matmul %17, %4, %cst_11 {dimension_numbers = #tpu.dot_dimension_numbers<[2], [2], [1], [1], [0, 0, 0, 1, 1, 1], [0], [0]>} : vector<2x2x32xf32>, vector<2x8x32xf32>, vector<2x2x8xf32> -> vector<2x2x8xf32>
    "tpu.trace_stop"() : () -> ()
    %cst_12 = arith.constant 0.0220970865 : f32
    %19 = vector.broadcast %cst_12 : f32 to vector<2x2x8xf32>
    %20 = arith.mulf %18, %19 : vector<2x2x8xf32>
    %21 = vector.shape_cast %20 : vector<2x2x8xf32> to vector<4x8xf32>
    %c0_13 = arith.constant 0 : index
    %c0_14 = arith.constant 0 : index
    %22 = vector.load %arg5[%c0_13, %c0_14] : memref<4x8xf32, #tpu.memory_space<vmem>>, vector<4x8xf32>
    %23 = arith.addf %21, %22 : vector<4x8xf32>
    %cst_15 = arith.constant 1.000000e+01 : f32
    %24 = vector.broadcast %cst_15 : f32 to vector<4x8xf32>
    %25 = arith.mulf %23, %24 : vector<4x8xf32>
    %cst_16 = arith.constant dense<0xFF800000> : vector<4xf32>
    %26 = vector.multi_reduction <maximumf>, %25, %cst_16 [1] : vector<4x8xf32> to vector<4xf32>
    %27 = vector.shape_cast %26 : vector<4xf32> to vector<4x1xf32>
    %28 = tpu.iota {dimensions = array<i32: 1>} : vector<4x8xi32>
    %29 = vector.broadcast %27 : vector<4x1xf32> to vector<4x8xf32>
    %30 = arith.cmpf oeq, %25, %29 : vector<4x8xf32>
    %c8_i32 = arith.constant 8 : i32
    %31 = vector.broadcast %c8_i32 : i32 to vector<4x8xi32>
    %32 = arith.select %30, %28, %31 : vector<4x8xi1>, vector<4x8xi32>
    %cst_17 = arith.constant dense<2147483647> : vector<4xi32>
    %33 = vector.multi_reduction <minsi>, %32, %cst_17 [1] : vector<4x8xi32> to vector<4xi32>
    %34 = vector.shape_cast %33 : vector<4xi32> to vector<4x1xi32>
    %35 = vector.broadcast %34 : vector<4x1xi32> to vector<4x8xi32>
    %36 = arith.cmpi eq, %28, %35 : vector<4x8xi32>
    %37 = arith.extui %36 : vector<4x8xi1> to vector<4x8xi32>
    %38 = arith.sitofp %37 : vector<4x8xi32> to vector<4x8xf32>
    %c0_18 = arith.constant 0 : index
    %c0_19 = arith.constant 0 : index
    %39 = vector.load %arg7[%c0_18, %c0_19] : memref<4x8xf32, #tpu.memory_space<vmem>>, vector<4x8xf32>
    tpu.vector_store %arg7[%c0_18, %c0_19], %38 {strides = array<i32>} : memref<4x8xf32, #tpu.memory_space<vmem>>, vector<4x8xf32>,
    %40 = vector.shape_cast %38 : vector<4x8xf32> to vector<2x2x8xf32>
    "tpu.trace_start"() <{level = 10 : i32, message = "bns,bsh->bnh"}> : () -> ()
    %cst_20 = arith.constant dense<0.000000e+00> : vector<2x2x32xf32>
    %41 = tpu.matmul %40, %0, %cst_20 {dimension_numbers = #tpu.dot_dimension_numbers<[2], [1], [1], [2], [0, 0, 0, 1, 1, 2], [0], [0]>} : vector<2x2x8xf32>, vector<2x8x32xf32>, vector<2x2x32xf32> -> vector<2x2x32xf32>
    "tpu.trace_stop"() : () -> ()
    %42 = vector.shape_cast %41 : vector<2x2x32xf32> to vector<4x32xf32>
    %c0_21 = arith.constant 0 : index
    %c0_22 = arith.constant 0 : index
    %43 = vector.load %arg6[%c0_21, %c0_22] : memref<4x32xf32, #tpu.memory_space<vmem>>, vector<4x32xf32>
    tpu.vector_store %arg6[%c0_21, %c0_22], %42 {strides = array<i32>} : memref<4x32xf32, #tpu.memory_space<vmem>>, vector<4x32xf32>,
    return
  }
  func.func @transform_0(%arg0: i32) -> (i32, i32, i32) {
    %c0_i32 = arith.constant 0 : i32
    %c0_i32_0 = arith.constant 0 : i32
    %c0_i32_1 = arith.constant 0 : i32
    return %arg0, %c0_i32, %c0_i32_0 : i32, i32, i32
  }
  func.func @transform_1(%arg0: i32) -> (i32, i32) {
    %c0_i32 = arith.constant 0 : i32
    %c0_i32_0 = arith.constant 0 : i32
    %c0_i32_1 = arith.constant 0 : i32
    return %c0_i32, %c0_i32_0 : i32, i32
  }
  func.func @transform_2(%arg0: i32) -> (i32, i32) {
    %c0_i32 = arith.constant 0 : i32
    %c0_i32_0 = arith.constant 0 : i32
    %c0_i32_1 = arith.constant 0 : i32
    return %c0_i32, %c0_i32_0 : i32, i32
  }
  func.func @transform_3(%arg0: i32) -> (i32, i32) {
    %c0_i32 = arith.constant 0 : i32
    %c0_i32_0 = arith.constant 0 : i32
    %c0_i32_1 = arith.constant 0 : i32
    return %c0_i32, %c0_i32_0 : i32, i32
  }
  func.func @transform_4(%arg0: i32) -> (i32, i32) {
    %c0_i32 = arith.constant 0 : i32
    %c0_i32_0 = arith.constant 0 : i32
    return %arg0, %c0_i32 : i32, i32
  }
  func.func @transform_5(%arg0: i32) -> (i32, i32) {
    %c0_i32 = arith.constant 0 : i32
    %c0_i32_0 = arith.constant 0 : i32
    return %arg0, %c0_i32 : i32, i32
  }
  func.func @transform_6(%arg0: i32) -> (i32, i32) {
    %c0_i32 = arith.constant 0 : i32
    %c0_i32_0 = arith.constant 0 : i32
    return %arg0, %c0_i32 : i32, i32
  }
}

</mosaic_0001>

<llo_original>
// kernel: tpu_custom_call.1
$region0: #{tpu_custom_call.1}
  #allocation0 [shape = 'u32[]', space=smem, size = 0x4, offset = 0x4, fixed_abs, tag = 'smem constant byte address 0x4 - core index']
  #allocation1 [shape = 'u32[144,128]{1,0:T(1,128)}', space=vmem, size = 0x12000, scoped, tag = 'internal scratch']
  %s0 = inlined_call_operand.hbm [shape: f32[2,8,32], index: 0, kind: input, shape index: {}]
  %s1 = inlined_call_operand.hbm [shape: f32[8,32], index: 1, kind: input, shape index: {}]
  %s2 = inlined_call_operand.hbm [shape: f32[32,32], index: 2, kind: input, shape index: {}]
  %s3 = inlined_call_operand.hbm [shape: f32[32,32], index: 3, kind: input, shape index: {}]
  %s4 = inlined_call_operand.vmem [shape: f32[4,8], index: 4, kind: input, shape index: {}]
  %s5 = inlined_call_operand.hbm [shape: f32[4,32], index: 5, kind: output, shape index: {0}]
  %s6 = inlined_call_operand.hbm [shape: f32[4,8], index: 6, kind: output, shape index: {1}]
  %7 = xla_tuple %s5, %s6
  %s8 = sld [smem:[#allocation0]]
  $region54: #{tpu_custom_call.1} parent=0
    _
  %s10 = ssub.s32 1, %s8
  %s11 = scalar_select 0, %s10, %s8
  $region1: #{tpu_custom_call.1} parent=0
    #allocation2 [shape = 'u8[8192]{0}', space=vmem, size = 0x2000, scoped, tag = 'input window, operand 0, single buffered']
    #allocation3 [shape = 's32[1]{0}', space=sflag, size = 0x4, scoped, tag = 'scoped memory for tpu_custom_call.1']
    #allocation4 [shape = 's32[1]{0}', space=sflag, size = 0x4, scoped, tag = 'scoped memory for tpu_custom_call.1']
    #allocation5 [shape = 'u8[4096]{0}', space=vmem, size = 0x1000, scoped, tag = 'input window, operand 1, single buffered']
    #allocation6 [shape = 's32[1]{0}', space=sflag, size = 0x4, scoped, tag = 'scoped memory for tpu_custom_call.1']
    #allocation7 [shape = 'u8[16384]{0}', space=vmem, size = 0x4000, scoped, tag = 'input window, operand 2, single buffered']
    #allocation8 [shape = 'u8[16384]{0}', space=vmem, size = 0x4000, scoped, tag = 'input window, operand 3, single buffered']
    #allocation9 [shape = 's32[1]{0}', space=sflag, size = 0x4, scoped, tag = 'scoped memory for tpu_custom_call.1']
    #allocation10 [shape = 'u8[2048]{0}', space=vmem, size = 0x800, scoped, tag = 'output window, operand 0, single buffered']
    #allocation11 [shape = 'u8[2048]{0}', space=vmem, size = 0x800, scoped, tag = 'output window, operand 1, single buffered']
    #allocation12 [shape = 's32[1]{0}', space=sflag, size = 0x4, scoped, tag = 'scoped memory for tpu_custom_call.1']
    %12 = vsyncpa [#allocation3], 0
    %13 = vsyncpa [#allocation6], 0
    %14 = vsyncpa [#allocation9], 0
    %15 = vsyncpa [#allocation4], 0
    %16 = vsyncpa [#allocation12], 0
    // Predicated region
    $region2: #{tpu_custom_call.1} parent=1 // pred_check
      _
    $region3: #{tpu_custom_call.1} parent=1 // pred_check_branch
      %18 = sbr.rel (0) target = $region5
    $region4: #{tpu_custom_call.1} parent=1 // pred_region
      %s20 = ssub.s32 256, 256
      %21 = vsyncadd [#allocation3], %s20
      %s22 = sshll.u32 [#allocation2], 4
      %s23 = int_to_ptr.vmem [resolvable:$true] %s22
      %28 = dma.hbm_to_vmem [thread:$0]  %s0, 256, %s23, [#allocation3], 128, 128, 8
    $region5: #{tpu_custom_call.1} parent=1 // pred_fallthru
      _
    // Predicated region
    $region6: #{tpu_custom_call.1} parent=1 // pred_check
      _
    $region7: #{tpu_custom_call.1} parent=1 // pred_check_branch
      %30 = sbr.rel (0) target = $region9
    $region8: #{tpu_custom_call.1} parent=1 // pred_region
      %s32 = ssub.s32 128, 128
      %33 = vsyncadd [#allocation6], %s32
      %s35 = sshll.u32 [#allocation5], 4
      %s36 = int_to_ptr.vmem [resolvable:$true] %s35
      %38 = dma.hbm_to_vmem [thread:$0]  %s1, 128, %s36, [#allocation6]
    $region9: #{tpu_custom_call.1} parent=1 // pred_fallthru
      _
    // Predicated region
    $region10: #{tpu_custom_call.1} parent=1 // pred_check
      _
    $region11: #{tpu_custom_call.1} parent=1 // pred_check_branch
      %40 = sbr.rel (0) target = $region13
    $region12: #{tpu_custom_call.1} parent=1 // pred_region
      %s42 = ssub.s32 512, 512
      %43 = vsyncadd [#allocation6], %s42
      %s44 = sshll.u32 [#allocation7], 4
      %s45 = int_to_ptr.vmem [resolvable:$true] %s44
      %50 = dma.hbm_to_vmem [thread:$0]  %s2, 512, %s45, [#allocation6], 128, 128, 8
    $region13: #{tpu_custom_call.1} parent=1 // pred_fallthru
      _
    // Predicated region
    $region14: #{tpu_custom_call.1} parent=1 // pred_check
      _
    $region15: #{tpu_custom_call.1} parent=1 // pred_check_branch
      %52 = sbr.rel (0) target = $region17
    $region16: #{tpu_custom_call.1} parent=1 // pred_region
      %s54 = ssub.s32 512, 512
      %55 = vsyncadd [#allocation9], %s54
      %s56 = sshll.u32 [#allocation8], 4
      %s57 = int_to_ptr.vmem [resolvable:$true] %s56
      %62 = dma.hbm_to_vmem [thread:$0]  %s3, 512, %s57, [#allocation9], 128, 128, 8
    $region17: #{tpu_custom_call.1} parent=1 // pred_fallthru
      _
    // Predicated region
    $region18: #{tpu_custom_call.1} parent=1 // pred_check
      _
    $region19: #{tpu_custom_call.1} parent=1 // pred_check_branch
      %64 = sbr.rel (0) target = $region21
    $region20: #{tpu_custom_call.1} parent=1 // pred_region
      _
    $region21: #{tpu_custom_call.1} parent=1 // pred_fallthru
      _
    // Predicated region
    $region22: #{tpu_custom_call.1} parent=1 // pred_check
      _
    $region23: #{tpu_custom_call.1} parent=1 // pred_check_branch
      %66 = sbr.rel (0) target = $region25
    $region24: #{tpu_custom_call.1} parent=1 // pred_region
      %67 = dma.done [#allocation3], 256
    $region25: #{tpu_custom_call.1} parent=1 // pred_fallthru
      _
    // Predicated region
    $region26: #{tpu_custom_call.1} parent=1 // pred_check
      _
    $region27: #{tpu_custom_call.1} parent=1 // pred_check_branch
      %69 = sbr.rel (0) target = $region29
    $region28: #{tpu_custom_call.1} parent=1 // pred_region
      %70 = dma.done [#allocation6], 128
    $region29: #{tpu_custom_call.1} parent=1 // pred_fallthru
      _
    // Predicated region
    $region30: #{tpu_custom_call.1} parent=1 // pred_check
      _
    $region31: #{tpu_custom_call.1} parent=1 // pred_check_branch
      %72 = sbr.rel (0) target = $region33
    $region32: #{tpu_custom_call.1} parent=1 // pred_region
      %73 = dma.done [#allocation6], 512
    $region33: #{tpu_custom_call.1} parent=1 // pred_fallthru
      _
    // Predicated region
    $region34: #{tpu_custom_call.1} parent=1 // pred_check
      _
    $region35: #{tpu_custom_call.1} parent=1 // pred_check_branch
      %75 = sbr.rel (0) target = $region37
    $region36: #{tpu_custom_call.1} parent=1 // pred_region
      %76 = dma.done [#allocation9], 512
    $region37: #{tpu_custom_call.1} parent=1 // pred_fallthru
      _
    %v77 = vld [vmem:[#allocation2] sm:$0xff]
    %v78 = vld [vmem:[#allocation2 + $0x8] sm:$0xff]
    %v79 = vld [vmem:[#allocation5] sm:$0xff]
    %v80 = vadd.f32 %v77, %v79
    %v81 = vadd.f32 %v78, %v79
    %vm82 = vcmask 261120
    %v83 = vsel %vm82, %v80, 0.0
    %v84 = vrot.slane %v83, 4
    %v85 = vadd.f32 %v83, %v84
    %v86 = vrot.slane %v85, 2
    %v87 = vadd.f32 %v85, %v86
    %v88 = vrot.slane %v87, 1
    %v89 = vadd.f32 %v87, %v88
    %v90 = vsel %vm82, %v81, 0.0
    %v91 = vrot.slane %v90, 4
    %v92 = vadd.f32 %v90, %v91
    %v93 = vrot.slane %v92, 2
    %v94 = vadd.f32 %v92, %v93
    %v95 = vrot.slane %v94, 1
    %v96 = vadd.f32 %v94, %v95
    %v97 = vld [vmem:[#allocation8] sm:$0xff]
    %v98 = vld [vmem:[#allocation8 + $0x8] sm:$0xff]
    %v99 = vld [vmem:[#allocation8 + $0x10] sm:$0xff]
    %v100 = vld [vmem:[#allocation8 + $0x18] sm:$0xff]
    %vm103 = vcmask 1041409
    %v104 = vsel %vm103, %v96, %v89
    %v105 = vsel %vm82, %v104, 0
    %107 = vmatprep.subr.mxu0 0.0
    %108 = vmatpush1.msra.mxu0 0.0
    %109 = vmatprep.subr.mxu0 0.0
    %110 = vmatpush1.msra.mxu0 0.0
    %111 = vmatprep.subr.mxu0 0.0
    %112 = vmatpush1.msra.mxu0 0.0
    %113 = vmatprep.subr.mxu0 0.0
    %114 = vmatpush1.msra.mxu0 0.0
    %115 = vmatprep.subr.mxu0 0.0
    %116 = vmatpush1.msra.mxu0 0.0
    %117 = vmatprep.subr.mxu0 0.0
    %118 = vmatpush1.msra.mxu0 0.0
    %119 = vmatprep.subr.mxu0 0.0
    %120 = vmatpush1.msra.mxu0 0.0
    %121 = vmatprep.subr.mxu0 0.0
    %122 = vmatpush1.msra.mxu0 0.0
    %123 = vmatprep.subr.mxu0 0.0
    %124 = vmatpush1.msra.mxu0 0.0
    %125 = vmatprep.subr.mxu0 0.0
    %126 = vmatpush1.msra.mxu0 0.0
    %127 = vmatprep.subr.mxu0 0.0
    %128 = vmatpush1.msra.mxu0 0.0
    %129 = vmatprep.subr.mxu0 0.0
    %130 = vmatpush1.msra.mxu0 0.0
    %131 = vmatprep.subr.mxu0 0.0
    %132 = vmatpush1.msra.mxu0 %v100
    %133 = vmatprep.subr.mxu0 0.0
    %134 = vmatpush1.msra.mxu0 %v99
    %135 = vmatprep.subr.mxu0 0.0
    %136 = vmatpush1.msra.mxu0 %v98
    %137 = vmatprep.subr.mxu0 0.0
    %138 = vmatpush1.msra.mxu0 %v97
    %139 = vmatprep.subr.mxu0 0.0
    %140 = vmatpush2.msra.mxu0 0.0
    %141 = vmatprep.subr.mxu0 0.0
    %142 = vmatpush2.msra.mxu0 0.0
    %143 = vmatprep.subr.mxu0 0.0
    %144 = vmatpush2.msra.mxu0 0.0
    %145 = vmatprep.subr.mxu0 0.0
    %146 = vmatpush2.msra.mxu0 0.0
    %147 = vmatprep.subr.mxu0 0.0
    %148 = vmatpush2.msra.mxu0 0.0
    %149 = vmatprep.subr.mxu0 0.0
    %150 = vmatpush2.msra.mxu0 0.0
    %151 = vmatprep.subr.mxu0 0.0
    %152 = vmatpush2.msra.mxu0 0.0
    %153 = vmatprep.subr.mxu0 0.0
    %154 = vmatpush2.msra.mxu0 0.0
    %155 = vmatprep.subr.mxu0 0.0
    %156 = vmatpush2.msra.mxu0 0.0
    %157 = vmatprep.subr.mxu0 0.0
    %158 = vmatpush2.msra.mxu0 0.0
    %159 = vmatprep.subr.mxu0 0.0
    %160 = vmatpush2.msra.mxu0 0.0
    %161 = vmatprep.subr.mxu0 0.0
    %162 = vmatpush2.msra.mxu0 0.0
    %163 = vmatprep.subr.mxu0 0.0
    %164 = vmatpush2.msra.mxu0 0.0
    %165 = vmatprep.subr.mxu0 0.0
    %166 = vmatpush2.msra.mxu0 0.0
    %167 = vmatprep.subr.mxu0 0.0
    %168 = vmatpush2.msra.mxu0 0.0
    %169 = vmatprep.subr.mxu0 0.0
    %170 = vmatpush2.msra.mxu0 0.0
    %171 = vmatprep.mubr.f32.mxu0 0.0
    %172 = vmatmul.mubr.f32.gmra.mxu0 %v105
    %v173 = vpop.f32.mrf.mxu0
    %v174 = vadd.f32 0.0, %v173
    %v175 = vpop.f32.mrf.mxu0
    %176 = vdwg.mxu0
    %v177 = vld [vmem:[#allocation7] sm:$0xff]
    %v178 = vld [vmem:[#allocation7 + $0x8] sm:$0xff]
    %v179 = vld [vmem:[#allocation7 + $0x10] sm:$0xff]
    %v180 = vld [vmem:[#allocation7 + $0x18] sm:$0xff]
    %vm181 = vcmask 130048
    %v183 = vsel %vm181, %v174, 0
    %v186 = vsel %vm181, %v177, 0
    %v189 = vsel %vm181, %v178, 0
    %v192 = vsel %vm181, %v179, 0
    %v195 = vsel %vm181, %v180, 0
    %197 = vmatprep.subr.mxu0 0.0
    %198 = vmatpush1.xpose.msra.mxu0 0.0
    %199 = vmatprep.subr.mxu0 0.0
    %200 = vmatpush1.xpose.msra.mxu0 0.0
    %201 = vmatprep.subr.mxu0 0.0
    %202 = vmatpush1.xpose.msra.mxu0 0.0
    %203 = vmatprep.subr.mxu0 0.0
    %204 = vmatpush1.xpose.msra.mxu0 0.0
    %205 = vmatprep.subr.mxu0 0.0
    %206 = vmatpush1.xpose.msra.mxu0 0.0
    %207 = vmatprep.subr.mxu0 0.0
    %208 = vmatpush1.xpose.msra.mxu0 0.0
    %209 = vmatprep.subr.mxu0 0.0
    %210 = vmatpush1.xpose.msra.mxu0 0.0
    %211 = vmatprep.subr.mxu0 0.0
    %212 = vmatpush1.xpose.msra.mxu0 0.0
    %213 = vmatprep.subr.mxu0 0.0
    %214 = vmatpush1.xpose.msra.mxu0 0.0
    %215 = vmatprep.subr.mxu0 0.0
    %216 = vmatpush1.xpose.msra.mxu0 0.0
    %217 = vmatprep.subr.mxu0 0.0
    %218 = vmatpush1.xpose.msra.mxu0 0.0
    %219 = vmatprep.subr.mxu0 0.0
    %220 = vmatpush1.xpose.msra.mxu0 0.0
    %221 = vmatprep.subr.mxu0 0.0
    %222 = vmatpush1.xpose.msra.mxu0 %v195
    %223 = vmatprep.subr.mxu0 0.0
    %224 = vmatpush1.xpose.msra.mxu0 %v192
    %225 = vmatprep.subr.mxu0 0.0
    %226 = vmatpush1.xpose.msra.mxu0 %v189
    %227 = vmatprep.subr.mxu0 0.0
    %228 = vmatpush1.xpose.msra.mxu0 %v186
    %229 = vmatprep.subr.mxu0 0.0
    %230 = vmatpush2.xpose.msra.mxu0 0.0
    %231 = vmatprep.subr.mxu0 0.0
    %232 = vmatpush2.xpose.msra.mxu0 0.0
    %233 = vmatprep.subr.mxu0 0.0
    %234 = vmatpush2.xpose.msra.mxu0 0.0
    %235 = vmatprep.subr.mxu0 0.0
    %236 = vmatpush2.xpose.msra.mxu0 0.0
    %237 = vmatprep.subr.mxu0 0.0
    %238 = vmatpush2.xpose.msra.mxu0 0.0
    %239 = vmatprep.subr.mxu0 0.0
    %240 = vmatpush2.xpose.msra.mxu0 0.0
    %241 = vmatprep.subr.mxu0 0.0
    %242 = vmatpush2.xpose.msra.mxu0 0.0
    %243 = vmatprep.subr.mxu0 0.0
    %244 = vmatpush2.xpose.msra.mxu0 0.0
    %245 = vmatprep.subr.mxu0 0.0
    %246 = vmatpush2.xpose.msra.mxu0 0.0
    %247 = vmatprep.subr.mxu0 0.0
    %248 = vmatpush2.xpose.msra.mxu0 0.0
    %249 = vmatprep.subr.mxu0 0.0
    %250 = vmatpush2.xpose.msra.mxu0 0.0
    %251 = vmatprep.subr.mxu0 0.0
    %252 = vmatpush2.xpose.msra.mxu0 0.0
    %253 = vmatprep.subr.mxu0 0.0
    %254 = vmatpush2.xpose.msra.mxu0 0.0
    %255 = vmatprep.subr.mxu0 0.0
    %256 = vmatpush2.xpose.msra.mxu0 0.0
    %257 = vmatprep.subr.mxu0 0.0
    %258 = vmatpush2.xpose.msra.mxu0 0.0
    %259 = vmatprep.subr.mxu0 0.0
    %260 = vmatpush2.xpose.msra.mxu0 0.0
    %261 = vmatprep.mubr.f32.mxu0 0.0
    %262 = vmatmul.mubr.f32.gmra.mxu0 %v183
    %v263 = vpop.f32.mrf.mxu0
    %v264 = vadd.f32 0.0, %v263
    %v265 = vpop.f32.mrf.mxu0
    %266 = vdwg.mxu0
    %267 = vrot.lane.b32.xlu0 %v174, 112
    %v268 = vpop.permute.xlu0 %267
    %269 = vrot.lane.b32.xlu0 %v177, 112
    %v270 = vpop.permute.xlu0 %269
    %271 = vrot.lane.b32.xlu0 %v178, 112
    %v272 = vpop.permute.xlu0 %271
    %273 = vrot.lane.b32.xlu0 %v179, 112
    %v274 = vpop.permute.xlu0 %273
    %275 = vrot.lane.b32.xlu0 %v180, 112
    %v276 = vpop.permute.xlu0 %275
    %v277 = vsel %vm181, %v268, 0
    %v279 = vsel %vm181, %v270, 0
    %v281 = vsel %vm181, %v272, 0
    %v283 = vsel %vm181, %v274, 0
    %v285 = vsel %vm181, %v276, 0
    %287 = vmatprep.subr.mxu0 0.0
    %288 = vmatpush1.xpose.msra.mxu0 0.0
    %289 = vmatprep.subr.mxu0 0.0
    %290 = vmatpush1.xpose.msra.mxu0 0.0
    %291 = vmatprep.subr.mxu0 0.0
    %292 = vmatpush1.xpose.msra.mxu0 0.0
    %293 = vmatprep.subr.mxu0 0.0
    %294 = vmatpush1.xpose.msra.mxu0 0.0
    %295 = vmatprep.subr.mxu0 0.0
    %296 = vmatpush1.xpose.msra.mxu0 0.0
    %297 = vmatprep.subr.mxu0 0.0
    %298 = vmatpush1.xpose.msra.mxu0 0.0
    %299 = vmatprep.subr.mxu0 0.0
    %300 = vmatpush1.xpose.msra.mxu0 0.0
    %301 = vmatprep.subr.mxu0 0.0
    %302 = vmatpush1.xpose.msra.mxu0 0.0
    %303 = vmatprep.subr.mxu0 0.0
    %304 = vmatpush1.xpose.msra.mxu0 0.0
    %305 = vmatprep.subr.mxu0 0.0
    %306 = vmatpush1.xpose.msra.mxu0 0.0
    %307 = vmatprep.subr.mxu0 0.0
    %308 = vmatpush1.xpose.msra.mxu0 0.0
    %309 = vmatprep.subr.mxu0 0.0
    %310 = vmatpush1.xpose.msra.mxu0 0.0
    %311 = vmatprep.subr.mxu0 0.0
    %312 = vmatpush1.xpose.msra.mxu0 %v285
    %313 = vmatprep.subr.mxu0 0.0
    %314 = vmatpush1.xpose.msra.mxu0 %v283
    %315 = vmatprep.subr.mxu0 0.0
    %316 = vmatpush1.xpose.msra.mxu0 %v281
    %317 = vmatprep.subr.mxu0 0.0
    %318 = vmatpush1.xpose.msra.mxu0 %v279
    %319 = vmatprep.subr.mxu0 0.0
    %320 = vmatpush2.xpose.msra.mxu0 0.0
    %321 = vmatprep.subr.mxu0 0.0
    %322 = vmatpush2.xpose.msra.mxu0 0.0
    %323 = vmatprep.subr.mxu0 0.0
    %324 = vmatpush2.xpose.msra.mxu0 0.0
    %325 = vmatprep.subr.mxu0 0.0
    %326 = vmatpush2.xpose.msra.mxu0 0.0
    %327 = vmatprep.subr.mxu0 0.0
    %328 = vmatpush2.xpose.msra.mxu0 0.0
    %329 = vmatprep.subr.mxu0 0.0
    %330 = vmatpush2.xpose.msra.mxu0 0.0
    %331 = vmatprep.subr.mxu0 0.0
    %332 = vmatpush2.xpose.msra.mxu0 0.0
    %333 = vmatprep.subr.mxu0 0.0
    %334 = vmatpush2.xpose.msra.mxu0 0.0
    %335 = vmatprep.subr.mxu0 0.0
    %336 = vmatpush2.xpose.msra.mxu0 0.0
    %337 = vmatprep.subr.mxu0 0.0
    %338 = vmatpush2.xpose.msra.mxu0 0.0
    %339 = vmatprep.subr.mxu0 0.0
    %340 = vmatpush2.xpose.msra.mxu0 0.0
    %341 = vmatprep.subr.mxu0 0.0
    %342 = vmatpush2.xpose.msra.mxu0 0.0
    %343 = vmatprep.subr.mxu0 0.0
    %344 = vmatpush2.xpose.msra.mxu0 0.0
    %345 = vmatprep.subr.mxu0 0.0
    %346 = vmatpush2.xpose.msra.mxu0 0.0
    %347 = vmatprep.subr.mxu0 0.0
    %348 = vmatpush2.xpose.msra.mxu0 0.0
    %349 = vmatprep.subr.mxu0 0.0
    %350 = vmatpush2.xpose.msra.mxu0 0.0
    %351 = vmatprep.mubr.f32.mxu0 0.0
    %352 = vmatmul.mubr.f32.gmra.mxu0 %v277
    %v353 = vpop.f32.mrf.mxu0
    %v354 = vadd.f32 0.0, %v353
    %v355 = vpop.f32.mrf.mxu0
    %356 = vdwg.mxu0
    %v359 = vunpack.c.l.s4 1966171168
    %v360 = vunpack.c.0.s8 %v359
    %v361 = vlaneseq
    %v362 = vshrl.u32 %v361, 7
    %v363 = vsub.s32 %v360, %v362
    %v364 = vrot.slane %v264, %v363
    %v365 = vcombine.high %v364, %v364
    %v367 = vunpack.c.l.s4 1966171168
    %v368 = vunpack.c.0.s8 %v367
    %v369 = vlaneseq
    %v370 = vshrl.u32 %v369, 7
    %v371 = vsub.s32 %v368, %v370
    %v372 = vrot.slane %v364, %v371
    %v374 = vunpack.c.l.s4 1966171168
    %v375 = vunpack.c.0.s8 %v374
    %v376 = vlaneseq
    %v377 = vshrl.u32 %v376, 7
    %v378 = vsub.s32 %v375, %v377
    %v379 = vrot.slane %v365, %v378
    %v384 = vunpack.c.l.s4 1966171168
    %v385 = vunpack.c.0.s8 %v384
    %v386 = vlaneseq
    %v387 = vshrl.u32 %v386, 7
    %v388 = vsub.s32 %v385, %v387
    %v389 = vrot.slane %v354, %v388
    %v390 = vcombine.high %v389, %v389
    %v392 = vunpack.c.l.s4 1966171168
    %v393 = vunpack.c.0.s8 %v392
    %v394 = vlaneseq
    %v395 = vshrl.u32 %v394, 7
    %v396 = vsub.s32 %v393, %v395
    %v397 = vrot.slane %v389, %v396
    %v399 = vunpack.c.l.s4 1966171168
    %v400 = vunpack.c.0.s8 %v399
    %v401 = vlaneseq
    %v402 = vshrl.u32 %v401, 7
    %v403 = vsub.s32 %v400, %v402
    %v404 = vrot.slane %v390, %v403
    %v405 = vlaneseq
    %v406 = vshrl.u32 %v405, 7
    %v407 = vsub.s32 0, %v406
    %v408 = vrot.slane %v397, %v407
    %v409 = vlaneseq
    %v410 = vshrl.u32 %v409, 7
    %v411 = vsub.s32 0, %v410
    %v412 = vrot.slane %v404, %v411
    %vm415 = vcmask 1040384
    %v416 = vsel %vm415, %v372, %v408
    %v417 = vsel %vm415, %v379, %v412
    %v419 = vsel %vm82, %v416, 0
    %v422 = vsel %vm82, %v80, 0
    %424 = vmatprep.subr.mxu0 0.0
    %425 = vmatpush1.xpose.msra.mxu0 0.0
    %426 = vmatprep.subr.mxu0 0.0
    %427 = vmatpush1.xpose.msra.mxu0 0.0
    %428 = vmatprep.subr.mxu0 0.0
    %429 = vmatpush1.xpose.msra.mxu0 0.0
    %430 = vmatprep.subr.mxu0 0.0
    %431 = vmatpush1.xpose.msra.mxu0 0.0
    %432 = vmatprep.subr.mxu0 0.0
    %433 = vmatpush1.xpose.msra.mxu0 0.0
    %434 = vmatprep.subr.mxu0 0.0
    %435 = vmatpush1.xpose.msra.mxu0 0.0
    %436 = vmatprep.subr.mxu0 0.0
    %437 = vmatpush1.xpose.msra.mxu0 0.0
    %438 = vmatprep.subr.mxu0 0.0
    %439 = vmatpush1.xpose.msra.mxu0 0.0
    %440 = vmatprep.subr.mxu0 0.0
    %441 = vmatpush1.xpose.msra.mxu0 0.0
    %442 = vmatprep.subr.mxu0 0.0
    %443 = vmatpush1.xpose.msra.mxu0 0.0
    %444 = vmatprep.subr.mxu0 0.0
    %445 = vmatpush1.xpose.msra.mxu0 0.0
    %446 = vmatprep.subr.mxu0 0.0
    %447 = vmatpush1.xpose.msra.mxu0 0.0
    %448 = vmatprep.subr.mxu0 0.0
    %449 = vmatpush1.xpose.msra.mxu0 0.0
    %450 = vmatprep.subr.mxu0 0.0
    %451 = vmatpush1.xpose.msra.mxu0 0.0
    %452 = vmatprep.subr.mxu0 0.0
    %453 = vmatpush1.xpose.msra.mxu0 0.0
    %454 = vmatprep.subr.mxu0 0.0
    %455 = vmatpush1.xpose.msra.mxu0 %v422
    %456 = vmatprep.subr.mxu0 0.0
    %457 = vmatpush2.xpose.msra.mxu0 0.0
    %458 = vmatprep.subr.mxu0 0.0
    %459 = vmatpush2.xpose.msra.mxu0 0.0
    %460 = vmatprep.subr.mxu0 0.0
    %461 = vmatpush2.xpose.msra.mxu0 0.0
    %462 = vmatprep.subr.mxu0 0.0
    %463 = vmatpush2.xpose.msra.mxu0 0.0
    %464 = vmatprep.subr.mxu0 0.0
    %465 = vmatpush2.xpose.msra.mxu0 0.0
    %466 = vmatprep.subr.mxu0 0.0
    %467 = vmatpush2.xpose.msra.mxu0 0.0
    %468 = vmatprep.subr.mxu0 0.0
    %469 = vmatpush2.xpose.msra.mxu0 0.0
    %470 = vmatprep.subr.mxu0 0.0
    %471 = vmatpush2.xpose.msra.mxu0 0.0
    %472 = vmatprep.subr.mxu0 0.0
    %473 = vmatpush2.xpose.msra.mxu0 0.0
    %474 = vmatprep.subr.mxu0 0.0
    %475 = vmatpush2.xpose.msra.mxu0 0.0
    %476 = vmatprep.subr.mxu0 0.0
    %477 = vmatpush2.xpose.msra.mxu0 0.0
    %478 = vmatprep.subr.mxu0 0.0
    %479 = vmatpush2.xpose.msra.mxu0 0.0
    %480 = vmatprep.subr.mxu0 0.0
    %481 = vmatpush2.xpose.msra.mxu0 0.0
    %482 = vmatprep.subr.mxu0 0.0
    %483 = vmatpush2.xpose.msra.mxu0 0.0
    %484 = vmatprep.subr.mxu0 0.0
    %485 = vmatpush2.xpose.msra.mxu0 0.0
    %486 = vmatprep.subr.mxu0 0.0
    %487 = vmatpush2.xpose.msra.mxu0 0.0
    %488 = vmatprep.mubr.f32.mxu0 0.0
    %489 = vmatmul.mubr.f32.gmra.mxu0 %v419
    %v490 = vpop.f32.mrf.mxu0
    %v491 = vadd.f32 0.0, %v490
    %v492 = vpop.f32.mrf.mxu0
    %493 = vdwg.mxu0
    %v495 = vsel %vm82, %v417, 0
    %v498 = vsel %vm82, %v81, 0
    %500 = vmatprep.subr.mxu0 0.0
    %501 = vmatpush1.xpose.msra.mxu0 0.0
    %502 = vmatprep.subr.mxu0 0.0
    %503 = vmatpush1.xpose.msra.mxu0 0.0
    %504 = vmatprep.subr.mxu0 0.0
    %505 = vmatpush1.xpose.msra.mxu0 0.0
    %506 = vmatprep.subr.mxu0 0.0
    %507 = vmatpush1.xpose.msra.mxu0 0.0
    %508 = vmatprep.subr.mxu0 0.0
    %509 = vmatpush1.xpose.msra.mxu0 0.0
    %510 = vmatprep.subr.mxu0 0.0
    %511 = vmatpush1.xpose.msra.mxu0 0.0
    %512 = vmatprep.subr.mxu0 0.0
    %513 = vmatpush1.xpose.msra.mxu0 0.0
    %514 = vmatprep.subr.mxu0 0.0
    %515 = vmatpush1.xpose.msra.mxu0 0.0
    %516 = vmatprep.subr.mxu0 0.0
    %517 = vmatpush1.xpose.msra.mxu0 0.0
    %518 = vmatprep.subr.mxu0 0.0
    %519 = vmatpush1.xpose.msra.mxu0 0.0
    %520 = vmatprep.subr.mxu0 0.0
    %521 = vmatpush1.xpose.msra.mxu0 0.0
    %522 = vmatprep.subr.mxu0 0.0
    %523 = vmatpush1.xpose.msra.mxu0 0.0
    %524 = vmatprep.subr.mxu0 0.0
    %525 = vmatpush1.xpose.msra.mxu0 0.0
    %526 = vmatprep.subr.mxu0 0.0
    %527 = vmatpush1.xpose.msra.mxu0 0.0
    %528 = vmatprep.subr.mxu0 0.0
    %529 = vmatpush1.xpose.msra.mxu0 0.0
    %530 = vmatprep.subr.mxu0 0.0
    %531 = vmatpush1.xpose.msra.mxu0 %v498
    %532 = vmatprep.subr.mxu0 0.0
    %533 = vmatpush2.xpose.msra.mxu0 0.0
    %534 = vmatprep.subr.mxu0 0.0
    %535 = vmatpush2.xpose.msra.mxu0 0.0
    %536 = vmatprep.subr.mxu0 0.0
    %537 = vmatpush2.xpose.msra.mxu0 0.0
    %538 = vmatprep.subr.mxu0 0.0
    %539 = vmatpush2.xpose.msra.mxu0 0.0
    %540 = vmatprep.subr.mxu0 0.0
    %541 = vmatpush2.xpose.msra.mxu0 0.0
    %542 = vmatprep.subr.mxu0 0.0
    %543 = vmatpush2.xpose.msra.mxu0 0.0
    %544 = vmatprep.subr.mxu0 0.0
    %545 = vmatpush2.xpose.msra.mxu0 0.0
    %546 = vmatprep.subr.mxu0 0.0
    %547 = vmatpush2.xpose.msra.mxu0 0.0
    %548 = vmatprep.subr.mxu0 0.0
    %549 = vmatpush2.xpose.msra.mxu0 0.0
    %550 = vmatprep.subr.mxu0 0.0
    %551 = vmatpush2.xpose.msra.mxu0 0.0
    %552 = vmatprep.subr.mxu0 0.0
    %553 = vmatpush2.xpose.msra.mxu0 0.0
    %554 = vmatprep.subr.mxu0 0.0
    %555 = vmatpush2.xpose.msra.mxu0 0.0
    %556 = vmatprep.subr.mxu0 0.0
    %557 = vmatpush2.xpose.msra.mxu0 0.0
    %558 = vmatprep.subr.mxu0 0.0
    %559 = vmatpush2.xpose.msra.mxu0 0.0
    %560 = vmatprep.subr.mxu0 0.0
    %561 = vmatpush2.xpose.msra.mxu0 0.0
    %562 = vmatprep.subr.mxu0 0.0
    %563 = vmatpush2.xpose.msra.mxu0 0.0
    %564 = vmatprep.mubr.f32.mxu0 0.0
    %565 = vmatmul.mubr.f32.gmra.mxu0 %v495
    %v566 = vpop.f32.mrf.mxu0
    %v567 = vadd.f32 0.0, %v566
    %v568 = vpop.f32.mrf.mxu0
    %569 = vdwg.mxu0
    %v570 = vmul.f32 %v491, 0.022097087
    %v571 = vmul.f32 %v567, 0.022097087
    %v572 = vld [vmem:[%s4] sm:$0xf]
    %v575 = vunpack.c.l.s4 1983009808
    %v576 = vunpack.c.0.s8 %v575
    %v577 = vlaneseq
    %v578 = vshrl.u32 %v577, 7
    %v579 = vsub.s32 %v576, %v578
    %v580 = vrot.slane %v572, %v579
    %v581 = vcombine.high %v580, %v580
    %v584 = vadd.f32 %v570, %v580
    %v585 = vadd.f32 %v571, %v581
    %v586 = vmul.f32 %v584, 10.0
    %v587 = vmul.f32 %v585, 10.0
    %v590 = vcombine.low %v586, %v587
    %v592 = vunpack.c.l.s4 1983009808
    %v593 = vunpack.c.0.s8 %v592
    %v594 = vlaneseq
    %v595 = vshrl.u32 %v594, 7
    %v596 = vsub.s32 %v593, %v595
    %v597 = vrot.slane %v590, %v596
    %vm599 = vcmask 60416
    %v600 = vsel %vm599, %v597, -inf
    %601 = vmax.xlane.f32.xlu0 %v600
    %v602 = vpop.xlane.xlu0 %601
    %v603 = vlaneseq
    %v604 = vand.u32 %v603, 127
    %v607 = vunpack.c.l.s4 269488144
    %v608 = vunpack.c.0.s8 %v607
    %v609 = vlaneseq
    %v610 = vshrl.u32 %v609, 7
    %v611 = vsub.s32 %v608, %v610
    %v612 = vrot.slane %v602, %v611
    %v614 = vunpack.c.l.s4 842150450
    %v615 = vunpack.c.0.s8 %v614
    %v616 = vlaneseq
    %v617 = vshrl.u32 %v616, 7
    %v618 = vsub.s32 %v615, %v617
    %v619 = vrot.slane %v602, %v618
    %vm622 = vcmp.eq.f32.partialorder %v586, %v612
    %vm623 = vcmp.eq.f32.partialorder %v587, %v619
    %v625 = vunpack.c.l.s4 1983009808
    %v626 = vunpack.c.0.s8 %v625
    %v627 = vlaneseq
    %v628 = vshrl.u32 %v627, 7
    %v629 = vsub.s32 %v626, %v628
    %v630 = vrot.slane %v604, %v629
    %v631 = vcombine.high %v630, %v630
    %v632 = vsel %vm622, %v630, 8
    %v633 = vsel %vm623, %v631, 8
    %v634 = vcombine.low %v632, %v633
    %v636 = vunpack.c.l.s4 1983009808
    %v637 = vunpack.c.0.s8 %v636
    %v638 = vlaneseq
    %v639 = vshrl.u32 %v638, 7
    %v640 = vsub.s32 %v637, %v639
    %v641 = vrot.slane %v634, %v640
    %v642 = vsel %vm599, %v641, 2147483647
    %v643 = vand.u32 %v642, 65535
    %v644 = vshra.s32 %v642, 16
    %v645 = vcvt.s32.f32 %v643
    %v646 = vcvt.s32.f32 %v644
    %647 = vmin.xlane.f32.xlu0 %v646
    %v648 = vpop.xlane.xlu0 %647
    %vm649 = vcmp.eq.f32.partialorder %v646, %v648
    %v650 = vsel %vm649, %v645, inf
    %651 = vmin.xlane.f32.xlu0 %v650
    %v652 = vpop.xlane.xlu0 %651
    %v653 = vcvt.f32.s32 %v652
    %v654 = vcvt.f32.s32 %v648
    %v655 = vshll.u32 %v654, 16
    %v656 = vadd.s32 %v655, %v653
    %vm657 = vcmp.eq.s32.totalorder %v604, %v656
    %v658 = vsel %vm657, 1, 0
    %v659 = vcvt.s32.f32 %v658
    %660 = vst.msk [vmem:[#allocation11] sm:$0xf] %vm599, %v659
    %v663 = vunpack.c.l.s4 1983009808
    %v664 = vunpack.c.0.s8 %v663
    %v665 = vlaneseq
    %v666 = vshrl.u32 %v665, 7
    %v667 = vsub.s32 %v664, %v666
    %v668 = vrot.slane %v659, %v667
    %v669 = vcombine.high %v668, %v668
    %vm670 = vcmask 64512
    %v671 = vsel %vm670, %v668, 0
    %673 = vmatprep.subr.mxu0 0.0
    %674 = vmatpush1.msra.mxu0 0.0
    %675 = vmatprep.subr.mxu0 0.0
    %676 = vmatpush1.msra.mxu0 0.0
    %677 = vmatprep.subr.mxu0 0.0
    %678 = vmatpush1.msra.mxu0 0.0
    %679 = vmatprep.subr.mxu0 0.0
    %680 = vmatpush1.msra.mxu0 0.0
    %681 = vmatprep.subr.mxu0 0.0
    %682 = vmatpush1.msra.mxu0 0.0
    %683 = vmatprep.subr.mxu0 0.0
    %684 = vmatpush1.msra.mxu0 0.0
    %685 = vmatprep.subr.mxu0 0.0
    %686 = vmatpush1.msra.mxu0 0.0
    %687 = vmatprep.subr.mxu0 0.0
    %688 = vmatpush1.msra.mxu0 0.0
    %689 = vmatprep.subr.mxu0 0.0
    %690 = vmatpush1.msra.mxu0 0.0
    %691 = vmatprep.subr.mxu0 0.0
    %692 = vmatpush1.msra.mxu0 0.0
    %693 = vmatprep.subr.mxu0 0.0
    %694 = vmatpush1.msra.mxu0 0.0
    %695 = vmatprep.subr.mxu0 0.0
    %696 = vmatpush1.msra.mxu0 0.0
    %697 = vmatprep.subr.mxu0 0.0
    %698 = vmatpush1.msra.mxu0 0.0
    %699 = vmatprep.subr.mxu0 0.0
    %700 = vmatpush1.msra.mxu0 0.0
    %701 = vmatprep.subr.mxu0 0.0
    %702 = vmatpush1.msra.mxu0 0.0
    %703 = vmatprep.subr.mxu0 0.0
    %704 = vmatpush1.msra.mxu0 %v77
    %705 = vmatprep.subr.mxu0 0.0
    %706 = vmatpush2.msra.mxu0 0.0
    %707 = vmatprep.subr.mxu0 0.0
    %708 = vmatpush2.msra.mxu0 0.0
    %709 = vmatprep.subr.mxu0 0.0
    %710 = vmatpush2.msra.mxu0 0.0
    %711 = vmatprep.subr.mxu0 0.0
    %712 = vmatpush2.msra.mxu0 0.0
    %713 = vmatprep.subr.mxu0 0.0
    %714 = vmatpush2.msra.mxu0 0.0
    %715 = vmatprep.subr.mxu0 0.0
    %716 = vmatpush2.msra.mxu0 0.0
    %717 = vmatprep.subr.mxu0 0.0
    %718 = vmatpush2.msra.mxu0 0.0
    %719 = vmatprep.subr.mxu0 0.0
    %720 = vmatpush2.msra.mxu0 0.0
    %721 = vmatprep.subr.mxu0 0.0
    %722 = vmatpush2.msra.mxu0 0.0
    %723 = vmatprep.subr.mxu0 0.0
    %724 = vmatpush2.msra.mxu0 0.0
    %725 = vmatprep.subr.mxu0 0.0
    %726 = vmatpush2.msra.mxu0 0.0
    %727 = vmatprep.subr.mxu0 0.0
    %728 = vmatpush2.msra.mxu0 0.0
    %729 = vmatprep.subr.mxu0 0.0
    %730 = vmatpush2.msra.mxu0 0.0
    %731 = vmatprep.subr.mxu0 0.0
    %732 = vmatpush2.msra.mxu0 0.0
    %733 = vmatprep.subr.mxu0 0.0
    %734 = vmatpush2.msra.mxu0 0.0
    %735 = vmatprep.subr.mxu0 0.0
    %736 = vmatpush2.msra.mxu0 0.0
    %737 = vmatprep.mubr.f32.mxu0 0.0
    %738 = vmatmul.mubr.f32.gmra.mxu0 %v671
    %v739 = vpop.f32.mrf.mxu0
    %v740 = vadd.f32 0.0, %v739
    %v741 = vpop.f32.mrf.mxu0
    %742 = vdwg.mxu0
    %v743 = vsel %vm670, %v669, 0
    %745 = vmatprep.subr.mxu0 0.0
    %746 = vmatpush1.msra.mxu0 0.0
    %747 = vmatprep.subr.mxu0 0.0
    %748 = vmatpush1.msra.mxu0 0.0
    %749 = vmatprep.subr.mxu0 0.0
    %750 = vmatpush1.msra.mxu0 0.0
    %751 = vmatprep.subr.mxu0 0.0
    %752 = vmatpush1.msra.mxu0 0.0
    %753 = vmatprep.subr.mxu0 0.0
    %754 = vmatpush1.msra.mxu0 0.0
    %755 = vmatprep.subr.mxu0 0.0
    %756 = vmatpush1.msra.mxu0 0.0
    %757 = vmatprep.subr.mxu0 0.0
    %758 = vmatpush1.msra.mxu0 0.0
    %759 = vmatprep.subr.mxu0 0.0
    %760 = vmatpush1.msra.mxu0 0.0
    %761 = vmatprep.subr.mxu0 0.0
    %762 = vmatpush1.msra.mxu0 0.0
    %763 = vmatprep.subr.mxu0 0.0
    %764 = vmatpush1.msra.mxu0 0.0
    %765 = vmatprep.subr.mxu0 0.0
    %766 = vmatpush1.msra.mxu0 0.0
    %767 = vmatprep.subr.mxu0 0.0
    %768 = vmatpush1.msra.mxu0 0.0
    %769 = vmatprep.subr.mxu0 0.0
    %770 = vmatpush1.msra.mxu0 0.0
    %771 = vmatprep.subr.mxu0 0.0
    %772 = vmatpush1.msra.mxu0 0.0
    %773 = vmatprep.subr.mxu0 0.0
    %774 = vmatpush1.msra.mxu0 0.0
    %775 = vmatprep.subr.mxu0 0.0
    %776 = vmatpush1.msra.mxu0 %v78
    %777 = vmatprep.subr.mxu0 0.0
    %778 = vmatpush2.msra.mxu0 0.0
    %779 = vmatprep.subr.mxu0 0.0
    %780 = vmatpush2.msra.mxu0 0.0
    %781 = vmatprep.subr.mxu0 0.0
    %782 = vmatpush2.msra.mxu0 0.0
    %783 = vmatprep.subr.mxu0 0.0
    %784 = vmatpush2.msra.mxu0 0.0
    %785 = vmatprep.subr.mxu0 0.0
    %786 = vmatpush2.msra.mxu0 0.0
    %787 = vmatprep.subr.mxu0 0.0
    %788 = vmatpush2.msra.mxu0 0.0
    %789 = vmatprep.subr.mxu0 0.0
    %790 = vmatpush2.msra.mxu0 0.0
    %791 = vmatprep.subr.mxu0 0.0
    %792 = vmatpush2.msra.mxu0 0.0
    %793 = vmatprep.subr.mxu0 0.0
    %794 = vmatpush2.msra.mxu0 0.0
    %795 = vmatprep.subr.mxu0 0.0
    %796 = vmatpush2.msra.mxu0 0.0
    %797 = vmatprep.subr.mxu0 0.0
    %798 = vmatpush2.msra.mxu0 0.0
    %799 = vmatprep.subr.mxu0 0.0
    %800 = vmatpush2.msra.mxu0 0.0
    %801 = vmatprep.subr.mxu0 0.0
    %802 = vmatpush2.msra.mxu0 0.0
    %803 = vmatprep.subr.mxu0 0.0
    %804 = vmatpush2.msra.mxu0 0.0
    %805 = vmatprep.subr.mxu0 0.0
    %806 = vmatpush2.msra.mxu0 0.0
    %807 = vmatprep.subr.mxu0 0.0
    %808 = vmatpush2.msra.mxu0 0.0
    %809 = vmatprep.mubr.f32.mxu0 0.0
    %810 = vmatmul.mubr.f32.gmra.mxu0 %v743
    %v811 = vpop.f32.mrf.mxu0
    %v812 = vadd.f32 0.0, %v811
    %v813 = vpop.f32.mrf.mxu0
    %814 = vdwg.mxu0
    %v817 = vcombine.low %v740, %v812
    %v819 = vunpack.c.l.s4 1983009808
    %v820 = vunpack.c.0.s8 %v819
    %v821 = vlaneseq
    %v822 = vshrl.u32 %v821, 7
    %v823 = vsub.s32 %v820, %v822
    %v824 = vrot.slane %v817, %v823
    %vm826 = vcmask 257024
    %827 = vst.msk [vmem:[#allocation10] sm:$0xf] %vm826, %v824
    // Predicated region
    $region38: #{tpu_custom_call.1} parent=1 // pred_check
      _
    $region39: #{tpu_custom_call.1} parent=1 // pred_check_branch
      %829 = sbr.rel (0) target = $region41
    $region40: #{tpu_custom_call.1} parent=1 // pred_region
      %s831 = ssub.s32 64, 64
      %832 = vsyncadd [#allocation4], %s831
      %s834 = sshll.u32 [#allocation10], 4
      %s835 = int_to_ptr.vmem [resolvable:$true] %s834
      %837 = dma.vmem_to_hbm [thread:$0]  %s835, 64, %s5, [#allocation4]
    $region41: #{tpu_custom_call.1} parent=1 // pred_fallthru
      _
    // Predicated region
    $region42: #{tpu_custom_call.1} parent=1 // pred_check
      _
    $region43: #{tpu_custom_call.1} parent=1 // pred_check_branch
      %839 = sbr.rel (0) target = $region45
    $region44: #{tpu_custom_call.1} parent=1 // pred_region
      %s841 = ssub.s32 64, 64
      %842 = vsyncadd [#allocation12], %s841
      %s844 = sshll.u32 [#allocation11], 4
      %s845 = int_to_ptr.vmem [resolvable:$true] %s844
      %847 = dma.vmem_to_hbm [thread:$0]  %s845, 64, %s6, [#allocation12]
    $region45: #{tpu_custom_call.1} parent=1 // pred_fallthru
      _
    // Predicated region
    $region46: #{tpu_custom_call.1} parent=1 // pred_check
      _
    $region47: #{tpu_custom_call.1} parent=1 // pred_check_branch
      %849 = sbr.rel (0) target = $region49
    $region48: #{tpu_custom_call.1} parent=1 // pred_region
      %850 = dma.done [#allocation4], 64
    $region49: #{tpu_custom_call.1} parent=1 // pred_fallthru
      _
    // Predicated region
    $region50: #{tpu_custom_call.1} parent=1 // pred_check
      _
    $region51: #{tpu_custom_call.1} parent=1 // pred_check_branch
      %852 = sbr.rel (0) target = $region53
    $region52: #{tpu_custom_call.1} parent=1 // pred_region
      %853 = dma.done [#allocation12], 64
    $region53: #{tpu_custom_call.1} parent=1 // pred_fallthru
      _
    %854 = vsyncpa [#allocation3], 1
    %855 = vsyncpa [#allocation6], 1
    %856 = vsyncpa [#allocation9], 1
    %857 = vsyncpa [#allocation4], 1
    %858 = vsyncpa [#allocation12], 1

</llo_original>
